<compile_context>
chip_gen: v5e
topology: v5e:2x2
jax: 0.10.0
libtpu: 0.0.40
codegen_flags: <defaults>
</compile_context>

<pallas_src>
import functools
import math

import jax
import jax.numpy as jnp
from jax.experimental import pallas as pl
from jax.experimental.pallas import tpu as pltpu


def _round_up(x, m):
    return ((x + m - 1) // m) * m


def _vmem_capacity_bytes():
    try:
        info = pltpu.get_tpu_info()
        return int(getattr(info, "vmem_capacity_bytes", 64 * 1024 * 1024))
    except Exception:
        return 64 * 1024 * 1024


def _bf16_element_chain_ok():
    # bf16 VPU/EUP exists on v6e / v7x; keep the element chain f32 on v5e & older.
    try:
        kind = jax.devices()[0].device_kind.lower()
    except Exception:
        return False
    return any(tag in kind for tag in ("v6", "v7", "7x"))


# ---------------------------------------------------------------------------
# Prologue: h = X @ W (bf16 in, f32 acc), negated per-node attention terms,
# and the "ones column" injected into a spare padded lane of h.
# ---------------------------------------------------------------------------
def _gat_prologue_kernel(x_ref, w_ref, a_src_ref, a_dst_ref,
                         h_ref, ns_src_ref, ns_dst_ref, *, ones_col):
    h = jnp.dot(x_ref[...], w_ref[...], preferred_element_type=jnp.float32)
    # ns_src[i] = -(a[:, :F] . h_i)   ns_dst[j] = -(a[:, F:] . h_j)
    # (negation hoisted here so the N^2 kernel saves one VPU op per element)
    ns_src_ref[...] = -jnp.sum(h * a_src_ref[...], axis=1, keepdims=True)
    ns_dst_ref[...] = -jnp.sum(h * a_dst_ref[...], axis=1, keepdims=True)
    if ones_col is not None:
        # spare padded lane of h := 1.0 so rowsum(e) comes out of the e@h matmul
        col = jax.lax.broadcasted_iota(jnp.int32, h.shape, 1)
        h = jnp.where(col == ones_col, 1.0, h)
    h_ref[...] = h.astype(h_ref.dtype)


# ---------------------------------------------------------------------------
# Main kernel: tiled over the (N_pad, N_pad) attention matrix.
#   grid = (row tiles i, reduction tiles k); reduction axis last / arbitrary.
# ---------------------------------------------------------------------------
def _gat_tile_kernel(adj_ref, ns_src_ref, ns_dst_ref, h_ref, o_ref, rowsum_ref,
                     *, alpha, concat, ones_col, tk, chain_dtype, h_resident):
    k = pl.program_id(1)
    use_ones_col = ones_col is not None

    @pl.when(k == 0)
    def _init():
        o_ref[...] = jnp.zeros_like(o_ref)
        if not use_ones_col:
            rowsum_ref[...] = jnp.zeros_like(rowsum_ref)

    # nl = -(s_src[i] + s_dst[j]);   -LeakyReLU(logits) == min(nl, alpha * nl)
    ns_s = ns_src_ref[...].astype(chain_dtype)            # (TM, 1)
    ns_d = ns_dst_ref[...].astype(chain_dtype)            # (1, TK)
    nl = ns_s + ns_d                                      # (TM, TK)
    if 0.0 <= alpha <= 1.0:
        nleaky = jnp.minimum(nl, nl * alpha)              # fused LeakyReLU+negate
    else:
        nleaky = jnp.where(nl < 0, nl, nl * alpha)        # general fallback
    # mask BEFORE the exp: non-edges become exp(-inf) == 0 exactly.
    e = jnp.exp(jnp.where(adj_ref[...] != 0, nleaky, -jnp.inf))

    if not use_ones_col:
        rowsum_ref[...] += jnp.sum(e.astype(jnp.float32), axis=1, keepdims=True)

    if h_resident:
        start = pl.multiple_of(k * tk, tk)
        h_blk = h_ref[pl.ds(start, tk), :]                # h resident in VMEM
    else:
        h_blk = h_ref[...]                                # streamed per k tile

    # Accumulate directly into the resident f32 output block (no acc scratch).
    o_ref[...] += jnp.dot(e.astype(h_blk.dtype), h_blk,
                          preferred_element_type=jnp.float32)

    @pl.when(k == pl.num_programs(1) - 1)
    def _finalize():
        acc = o_ref[...]
        if use_ones_col:
            col = jax.lax.broadcasted_iota(jnp.int32, acc.shape, 1)
            rs = jnp.sum(jnp.where(col == ones_col, acc, 0.0),
                         axis=1, keepdims=True)
        else:
            rs = rowsum_ref[...]
        # guard isolated nodes (rowsum == 0); reference would produce NaN there
        rs = jnp.where(rs == 0.0, 1.0, rs)
        hp = acc * (1.0 / rs)                             # exact f32 divide, (TM,1)
        if concat:
            # ELU (alpha = 1.0, PyTorch default)
            hp = jnp.where(hp > 0, hp, jnp.exp(jnp.minimum(hp, 0.0)) - 1.0)
        o_ref[...] = hp


def sp_graph_attention_layer(x, adj, W, a, *, alpha, concat=True):
    """x: (N, F_in), adj: (N, N) nonzero == edge (int8/bool preferred),
    W: (F_in, F_out), a: (1, 2*F_out)."""
    N, f_in = x.shape
    f_out = W.shape[1]

    # ---- tiling / padding ----------------------------------------------------
    tk = 512 if N >= 512 else _round_up(N, 128)           # reduction/column tile
    n_pad = _round_up(N, tk)
    f_pad = _round_up(f_out, 128)                         # lane-dense features
    ones_col = f_out if f_pad > f_out else None           # spare lane for rowsum

    vmem_cap = _vmem_capacity_bytes()
    budget = int(vmem_cap * 0.6)                          # leave compiler headroom

    h_bytes = n_pad * f_pad * 2                           # bf16 h
    h_resident = 2 * h_bytes <= budget // 2               # single-DMA h if it fits

    # Row tile TM: as large as the budget allows; keep >= 2 row tiles (megacore).
    tm = None
    for cand in (2048, 1024, 512, 256, 128):
        if cand > n_pad or n_pad % cand != 0:
            continue
        if n_pad >= 256 and n_pad // cand < 2:
            continue                                      # feed both TCs on v7x
        need = (2 * cand * tk                             # int8 adj, double-buffered
                + 2 * cand * f_pad * 4                    # f32 out block, 2 buffers
                + (2 * h_bytes if h_resident else 2 * tk * f_pad * 2)
                + cand * 4 + (1 << 20))                   # rowsum scratch + slack
        if need <= budget:
            tm = cand
            break
    if tm is None:
        tm = 128                                          # n_pad is a multiple of 128
    need = (2 * tm * tk + 2 * tm * f_pad * 4
            + (2 * h_bytes if h_resident else 2 * tk * f_pad * 2) + tm * 4)
    vmem_limit = int(min(max(need + (8 << 20), 32 << 20), int(vmem_cap * 0.75)))

    chain_dtype = jnp.bfloat16 if _bf16_element_chain_ok() else jnp.float32

    # ---- operand preparation ---------------------------------------------------
    x_bf = jnp.pad(x.astype(jnp.bfloat16), ((0, n_pad - N), (0, 0)))
    w_bf = jnp.pad(W.astype(jnp.bfloat16), ((0, 0), (0, f_pad - f_out)))
    a_src = jnp.pad(a[:, :f_out].astype(jnp.float32), ((0, 0), (0, f_pad - f_out)))
    a_dst = jnp.pad(a[:, f_out:].astype(jnp.float32), ((0, 0), (0, f_pad - f_out)))
    # int8 adjacency: 4x less HBM than f32; pass int8/bool to skip the conversion.
    adj_i8 = adj if adj.dtype == jnp.int8 else (adj != 0).astype(jnp.int8)
    adj_i8 = jnp.pad(adj_i8, ((0, n_pad - N), (0, n_pad - N)))

    # ---- prologue: h (bf16 + ones column), -s_src, -s_dst ----------------------
    tp = tm if tm <= 512 else 512
    prologue = functools.partial(_gat_prologue_kernel, ones_col=ones_col)
    h_bf16, ns_src, ns_dst = pl.pallas_call(
        prologue,
        out_shape=(jax.ShapeDtypeStruct((n_pad, f_pad), jnp.bfloat16),
                   jax.ShapeDtypeStruct((n_pad, 1), jnp.float32),
                   jax.ShapeDtypeStruct((n_pad, 1), jnp.float32)),
        grid=(n_pad // tp,),
        in_specs=[pl.BlockSpec((tp, f_in), lambda i: (i, 0)),
                  pl.BlockSpec((f_in, f_pad), lambda i: (0, 0)),
                  pl.BlockSpec((1, f_pad), lambda i: (0, 0)),
                  pl.BlockSpec((1, f_pad), lambda i: (0, 0))],
        out_specs=(pl.BlockSpec((tp, f_pad), lambda i: (i, 0)),
                   pl.BlockSpec((tp, 1), lambda i: (i, 0)),
                   pl.BlockSpec((tp, 1), lambda i: (i, 0))),
        compiler_params=pltpu.CompilerParams(dimension_semantics=("parallel",)),
    )(x_bf, w_bf, a_src, a_dst)

    # -s_dst as a (1, N_pad) row so attention tiles slice a lane-dense (1, TK).
    ns_dst_row = ns_dst.reshape(1, n_pad)

    # ---- tiled attention --------------------------------------------------------
    kernel = functools.partial(
        _gat_tile_kernel, alpha=float(alpha), concat=bool(concat),
        ones_col=ones_col, tk=tk, chain_dtype=chain_dtype, h_resident=h_resident)

    h_spec = (pl.BlockSpec((n_pad, f_pad), lambda i, k: (0, 0)) if h_resident
              else pl.BlockSpec((tk, f_pad), lambda i, k: (k, 0)))

    out = pl.pallas_call(
        kernel,
        out_shape=jax.ShapeDtypeStruct((n_pad, f_pad), jnp.float32),
        grid=(n_pad // tm, n_pad // tk),
        in_specs=[pl.BlockSpec((tm, tk), lambda i, k: (i, k)),     # adj (int8)
                  pl.BlockSpec((tm, 1), lambda i, k: (i, 0)),      # -s_src column
                  pl.BlockSpec((1, tk), lambda i, k: (0, k)),      # -s_dst row
                  h_spec],                                         # h (bf16)
        out_specs=pl.BlockSpec((tm, f_pad), lambda i, k: (i, 0)),
        scratch_shapes=[pltpu.VMEM((tm, 1), jnp.float32)],         # rowsum fallback
        compiler_params=pltpu.CompilerParams(
            dimension_semantics=("parallel", "arbitrary"),
            vmem_limit_bytes=vmem_limit),
    )(adj_i8, ns_src, ns_dst_row, h_bf16)

    return out[:N, :f_out]


def xavier_normal(key, shape, gain):
    fan_in, fan_out = shape[0], shape[1]
    std = gain * math.sqrt(2.0 / (fan_in + fan_out))
    return std * jax.random.normal(key, shape, dtype=jnp.float32)


if __name__ == "__main__":
    # Small shapes consistent with the module: N nodes, F_in -> F_out
    N, F_IN, F_OUT = 128, 16, 32
    ALPHA = 0.2          # LeakyReLU negative slope
    CONCAT = True

    key = jax.random.PRNGKey(0)
    k_x, k_adj, k_w, k_a = jax.random.split(key, 4)

    # deterministic parameter init (xavier_normal_, gain=1.414)
    W = xavier_normal(k_w, (F_IN, F_OUT), gain=1.414)
    a = xavier_normal(k_a, (1, 2 * F_OUT), gain=1.414)

    # node features
    x = jax.random.normal(k_x, (N, F_IN), dtype=jnp.float32)

    # random sparse-ish adjacency with self-loops (avoids empty rows -> NaN div)
    adj_f32 = (jax.random.uniform(k_adj, (N, N)) < 0.1).astype(jnp.float32)
    adj_f32 = jnp.maximum(adj_f32, jnp.eye(N, dtype=jnp.float32))
    # pre-baked int8 edge mask (reused across heads / layers in a real model)
    adj_i8 = (adj_f32 != 0).astype(jnp.int8)

    out = sp_graph_attention_layer(x, adj_i8, W, a, alpha=ALPHA, concat=CONCAT)
    out = jax.block_until_ready(out)

    # pure-JAX reference (dense masked form of the sparse spmm)
    h = x @ W
    logits = (h @ a[:, :F_OUT].T) + (h @ a[:, F_OUT:].T).T
    leaky = jnp.where(logits > 0, logits, ALPHA * logits)
    e = jnp.where(adj_f32 != 0, jnp.exp(-leaky), 0.0)
    ref = (e @ h) / e.sum(axis=1, keepdims=True)
    if CONCAT:
        ref = jnp.where(ref > 0, ref, jnp.expm1(ref))

    assert out.shape == (N, F_OUT)
    assert not bool(jnp.isnan(out).any())
    assert bool(jnp.allclose(out, ref, rtol=5e-2, atol=5e-2))
    print("KERNEL_OK")
</pallas_src>

<mosaic_0001>
module attributes {stable_mosaic.version = 11 : i64} {
  func.func @_gat_prologue_kernel(%arg0: i32, %arg1: memref<128x16xbf16, #tpu.memory_space<vmem>>, %arg2: memref<16x128xbf16, #tpu.memory_space<vmem>>, %arg3: memref<1x128xf32, #tpu.memory_space<vmem>>, %arg4: memref<1x128xf32, #tpu.memory_space<vmem>>, %arg5: memref<128x128xbf16, #tpu.memory_space<vmem>>, %arg6: memref<128x1xf32, #tpu.memory_space<vmem>>, %arg7: memref<128x1xf32, #tpu.memory_space<vmem>>) attributes {dimension_semantics = [#tpu.dimension_semantics<parallel>], iteration_bounds = array<i64: 1>, scalar_prefetch = 0 : i64, scratch_operands = 0 : i64, tpu.core_type = #tpu.core_type<tc>, window_params = [{transform_indices = @transform_0, window_bounds = array<i64: 128, 16>}, {pipeline_mode = #tpu.pipeline_mode<synchronous>, transform_indices = @transform_1, window_bounds = array<i64: 16, 128>}, {pipeline_mode = #tpu.pipeline_mode<synchronous>, transform_indices = @transform_2, window_bounds = array<i64: 1, 128>}, {pipeline_mode = #tpu.pipeline_mode<synchronous>, transform_indices = @transform_3, window_bounds = array<i64: 1, 128>}, {transform_indices = @transform_4, window_bounds = array<i64: 128, 128>}, {transform_indices = @transform_5, window_bounds = array<i64: 128, 1>}, {transform_indices = @transform_6, window_bounds = array<i64: 128, 1>}]} {
    %c0 = arith.constant 0 : index
    %c0_0 = arith.constant 0 : index
    %0 = vector.load %arg1[%c0, %c0_0] : memref<128x16xbf16, #tpu.memory_space<vmem>>, vector<128x16xbf16>
    %c0_1 = arith.constant 0 : index
    %c0_2 = arith.constant 0 : index
    %1 = vector.load %arg2[%c0_1, %c0_2] : memref<16x128xbf16, #tpu.memory_space<vmem>>, vector<16x128xbf16>
    %cst = arith.constant dense<0.000000e+00> : vector<128x128xf32>
    %2 = tpu.matmul %0, %1, %cst {dimension_numbers = #tpu.dot_dimension_numbers<[1], [0], [0], [1], [0, 0, 1, 1], [], []>} : vector<128x16xbf16>, vector<16x128xbf16>, vector<128x128xf32> -> vector<128x128xf32>
    %c0_3 = arith.constant 0 : index
    %c0_4 = arith.constant 0 : index
    %3 = vector.load %arg3[%c0_3, %c0_4] : memref<1x128xf32, #tpu.memory_space<vmem>>, vector<1x128xf32>
    %4 = vector.broadcast %3 : vector<1x128xf32> to vector<128x128xf32>
    %5 = arith.mulf %2, %4 : vector<128x128xf32>
    %cst_5 = arith.constant dense<0.000000e+00> : vector<128xf32>
    %6 = vector.multi_reduction <add>, %5, %cst_5 [1] : vector<128x128xf32> to vector<128xf32>
    %7 = vector.shape_cast %6 : vector<128xf32> to vector<128x1xf32>
    %cst_6 = arith.constant 0.000000e+00 : f32
    %8 = vector.broadcast %cst_6 : f32 to vector<128x1xf32>
    %9 = arith.subf %8, %7 : vector<128x1xf32>
    %c0_7 = arith.constant 0 : index
    %c0_8 = arith.constant 0 : index
    %10 = vector.load %arg6[%c0_7, %c0_8] : memref<128x1xf32, #tpu.memory_space<vmem>>, vector<128x1xf32>
    tpu.vector_store %arg6[%c0_7, %c0_8], %9 {strides = array<i32>} : memref<128x1xf32, #tpu.memory_space<vmem>>, vector<128x1xf32>,
    %c0_9 = arith.constant 0 : index
    %c0_10 = arith.constant 0 : index
    %11 = vector.load %arg4[%c0_9, %c0_10] : memref<1x128xf32, #tpu.memory_space<vmem>>, vector<1x128xf32>
    %12 = vector.broadcast %11 : vector<1x128xf32> to vector<128x128xf32>
    %13 = arith.mulf %2, %12 : vector<128x128xf32>
    %cst_11 = arith.constant dense<0.000000e+00> : vector<128xf32>
    %14 = vector.multi_reduction <add>, %13, %cst_11 [1] : vector<128x128xf32> to vector<128xf32>
    %15 = vector.shape_cast %14 : vector<128xf32> to vector<128x1xf32>
    %cst_12 = arith.constant 0.000000e+00 : f32
    %16 = vector.broadcast %cst_12 : f32 to vector<128x1xf32>
    %17 = arith.subf %16, %15 : vector<128x1xf32>
    %c0_13 = arith.constant 0 : index
    %c0_14 = arith.constant 0 : index
    %18 = vector.load %arg7[%c0_13, %c0_14] : memref<128x1xf32, #tpu.memory_space<vmem>>, vector<128x1xf32>
    tpu.vector_store %arg7[%c0_13, %c0_14], %17 {strides = array<i32>} : memref<128x1xf32, #tpu.memory_space<vmem>>, vector<128x1xf32>,
    %19 = tpu.iota {dimensions = array<i32: 1>} : vector<128x128xi32>
    %c32_i32 = arith.constant 32 : i32
    %20 = vector.broadcast %c32_i32 : i32 to vector<128x128xi32>
    %21 = arith.cmpi eq, %19, %20 : vector<128x128xi32>
    %cst_15 = arith.constant 1.000000e+00 : f32
    %22 = vector.broadcast %cst_15 : f32 to vector<128x128xf32>
    %23 = arith.select %21, %22, %2 : vector<128x128xi1>, vector<128x128xf32>
    %24 = arith.truncf %23 : vector<128x128xf32> to vector<128x128xbf16>
    %c0_16 = arith.constant 0 : index
    %c0_17 = arith.constant 0 : index
    %25 = vector.load %arg5[%c0_16, %c0_17] : memref<128x128xbf16, #tpu.memory_space<vmem>>, vector<128x128xbf16>
    tpu.vector_store %arg5[%c0_16, %c0_17], %24 {strides = array<i32>} : memref<128x128xbf16, #tpu.memory_space<vmem>>, vector<128x128xbf16>,
    return
  }
  func.func @transform_0(%arg0: i32) -> (i32, i32) {
    %c0_i32 = arith.constant 0 : i32
    %c0_i32_0 = arith.constant 0 : i32
    return %arg0, %c0_i32 : i32, i32
  }
  func.func @transform_1(%arg0: i32) -> (i32, i32) {
    %c0_i32 = arith.constant 0 : i32
    %c0_i32_0 = arith.constant 0 : i32
    %c0_i32_1 = arith.constant 0 : i32
    return %c0_i32, %c0_i32_0 : i32, i32
  }
  func.func @transform_2(%arg0: i32) -> (i32, i32) {
    %c0_i32 = arith.constant 0 : i32
    %c0_i32_0 = arith.constant 0 : i32
    %c0_i32_1 = arith.constant 0 : i32
    return %c0_i32, %c0_i32_0 : i32, i32
  }
  func.func @transform_3(%arg0: i32) -> (i32, i32) {
    %c0_i32 = arith.constant 0 : i32
    %c0_i32_0 = arith.constant 0 : i32
    %c0_i32_1 = arith.constant 0 : i32
    return %c0_i32, %c0_i32_0 : i32, i32
  }
  func.func @transform_4(%arg0: i32) -> (i32, i32) {
    %c0_i32 = arith.constant 0 : i32
    %c0_i32_0 = arith.constant 0 : i32
    return %arg0, %c0_i32 : i32, i32
  }
  func.func @transform_5(%arg0: i32) -> (i32, i32) {
    %c0_i32 = arith.constant 0 : i32
    %c0_i32_0 = arith.constant 0 : i32
    return %arg0, %c0_i32 : i32, i32
  }
  func.func @transform_6(%arg0: i32) -> (i32, i32) {
    %c0_i32 = arith.constant 0 : i32
    %c0_i32_0 = arith.constant 0 : i32
    return %arg0, %c0_i32 : i32, i32
  }
}

</mosaic_0001>

<llo_original>
// kernel: tpu_custom_call.1
$region0: #{tpu_custom_call.1}
  #allocation0 [shape = 'u32[]', space=smem, size = 0x4, offset = 0x4, fixed_abs, tag = 'smem constant byte address 0x4 - core index']
  #allocation1 [shape = 'u32[72,128]{1,0:T(1,128)}', space=vmem, size = 0x9000, scoped, tag = 'internal scratch']
  %s0 = inlined_call_operand.vmem [shape: bf16[128,16], index: 0, kind: input, shape index: {}]
  %s1 = inlined_call_operand.vmem [shape: bf16[16,128], index: 1, kind: input, shape index: {}]
  %s2 = inlined_call_operand.vmem [shape: f32[1,128], index: 2, kind: input, shape index: {}]
  %s3 = inlined_call_operand.vmem [shape: f32[1,128], index: 3, kind: input, shape index: {}]
  %s4 = inlined_call_operand.hbm [shape: bf16[128,128], index: 4, kind: output, shape index: {0}]
  %s5 = inlined_call_operand.vmem [shape: f32[128,1], index: 5, kind: output, shape index: {1}]
  %s6 = inlined_call_operand.vmem [shape: f32[128,1], index: 6, kind: output, shape index: {2}]
  %7 = xla_tuple %s4, %s5, %s6
  %s8 = sld [smem:[#allocation0]]
  $region42: #{tpu_custom_call.1} parent=0
    _
  %s10 = ssub.s32 1, %s8
  %s11 = scalar_select 0, %s10, %s8
  $region1: #{tpu_custom_call.1} parent=0
    #allocation2 [shape = 'u8[32768]{0}', space=vmem, size = 0x8000, scoped, tag = 'output window, operand 0, single buffered']
    #allocation3 [shape = 's32[1]{0}', space=sflag, size = 0x4, scoped, tag = 'scoped memory for tpu_custom_call.1']
    %12 = vsyncpa [#allocation3], 0
    // Predicated region
    $region2: #{tpu_custom_call.1} parent=1 // pred_check
      _
    $region3: #{tpu_custom_call.1} parent=1 // pred_check_branch
      %14 = sbr.rel (0) target = $region5
    $region4: #{tpu_custom_call.1} parent=1 // pred_region
      _
    $region5: #{tpu_custom_call.1} parent=1 // pred_fallthru
      _
    // Predicated region
    $region6: #{tpu_custom_call.1} parent=1 // pred_check
      _
    $region7: #{tpu_custom_call.1} parent=1 // pred_check_branch
      %16 = sbr.rel (0) target = $region9
    $region8: #{tpu_custom_call.1} parent=1 // pred_region
      _
    $region9: #{tpu_custom_call.1} parent=1 // pred_fallthru
      _
    // Predicated region
    $region10: #{tpu_custom_call.1} parent=1 // pred_check
      _
    $region11: #{tpu_custom_call.1} parent=1 // pred_check_branch
      %18 = sbr.rel (0) target = $region13
    $region12: #{tpu_custom_call.1} parent=1 // pred_region
      _
    $region13: #{tpu_custom_call.1} parent=1 // pred_fallthru
      _
    // Predicated region
    $region14: #{tpu_custom_call.1} parent=1 // pred_check
      _
    $region15: #{tpu_custom_call.1} parent=1 // pred_check_branch
      %20 = sbr.rel (0) target = $region17
    $region16: #{tpu_custom_call.1} parent=1 // pred_region
      _
    $region17: #{tpu_custom_call.1} parent=1 // pred_fallthru
      _
    %v22 = vld [vmem:[%s0] sm:$0xf]
    %v23 = vld [vmem:[%s0 + $0x4] sm:$0xf]
    %v24 = vld [vmem:[%s0 + $0x8] sm:$0xf]
    %v25 = vld [vmem:[%s0 + $0xc] sm:$0xf]
    %v26 = vld [vmem:[%s0 + $0x10] sm:$0xf]
    %v27 = vld [vmem:[%s0 + $0x14] sm:$0xf]
    %v28 = vld [vmem:[%s0 + $0x18] sm:$0xf]
    %v29 = vld [vmem:[%s0 + $0x1c] sm:$0xf]
    %v30 = vld [vmem:[%s0 + $0x20] sm:$0xf]
    %v31 = vld [vmem:[%s0 + $0x24] sm:$0xf]
    %v32 = vld [vmem:[%s0 + $0x28] sm:$0xf]
    %v33 = vld [vmem:[%s0 + $0x2c] sm:$0xf]
    %v34 = vld [vmem:[%s0 + $0x30] sm:$0xf]
    %v35 = vld [vmem:[%s0 + $0x34] sm:$0xf]
    %v36 = vld [vmem:[%s0 + $0x38] sm:$0xf]
    %v37 = vld [vmem:[%s0 + $0x3c] sm:$0xf]
    %v38 = vld [vmem:[%s1] sm:$0xf]
    %v39 = vld [vmem:[%s1 + $0x4] sm:$0xf]
    %v56 = vunpack.c.l.b16 %v22
    %v57 = vunpack.c.l.b16 %v23
    %v58 = vunpack.c.l.b16 %v24
    %v59 = vunpack.c.l.b16 %v25
    %v60 = vunpack.c.l.b16 %v26
    %v61 = vunpack.c.l.b16 %v27
    %v62 = vunpack.c.l.b16 %v28
    %v63 = vunpack.c.l.b16 %v29
    %v64 = vunpack.c.l.b16 %v30
    %v65 = vunpack.c.l.b16 %v31
    %v66 = vunpack.c.l.b16 %v32
    %v67 = vunpack.c.l.b16 %v33
    %v68 = vunpack.c.l.b16 %v34
    %v69 = vunpack.c.l.b16 %v35
    %v70 = vunpack.c.l.b16 %v36
    %v71 = vunpack.c.l.b16 %v37
    %v72 = vpack.c.b16 %v57, %v56
    %v73 = vpack.c.b16 %v59, %v58
    %v74 = vpack.c.b16 %v61, %v60
    %v75 = vpack.c.b16 %v63, %v62
    %v76 = vpack.c.b16 %v65, %v64
    %v77 = vpack.c.b16 %v67, %v66
    %v78 = vpack.c.b16 %v69, %v68
    %v79 = vpack.c.b16 %v71, %v70
    %v82 = vunpack.c.l.b16 %v38
    %v83 = vunpack.c.l.b16 %v39
    %v84 = vpack.c.b16 %v83, %v82
    %vm86 = vcmask 130048
    %v88 = vsel %vm86, %v72, 0
    %v91 = vsel %vm86, %v73, 0
    %v94 = vsel %vm86, %v74, 0
    %v97 = vsel %vm86, %v75, 0
    %v100 = vsel %vm86, %v76, 0
    %v103 = vsel %vm86, %v77, 0
    %v106 = vsel %vm86, %v78, 0
    %v109 = vsel %vm86, %v79, 0
    %111 = vmatpush.bf16.msra.mxu0 0
    %112 = vmatpush.bf16.msra.mxu0 0
    %113 = vmatpush.bf16.msra.mxu0 0
    %114 = vmatpush.bf16.msra.mxu0 0
    %115 = vmatpush.bf16.msra.mxu0 0
    %116 = vmatpush.bf16.msra.mxu0 0
    %117 = vmatpush.bf16.msra.mxu0 0
    %118 = vmatpush.bf16.msra.mxu0 %v84
    %119 = vmatmul.bf16.gmra.mxu0 %v88
    %v120 = vpop.f32.mrf.mxu0
    %v121 = vadd.f32 0.0, %v120
    %v122 = vpop.f32.mrf.mxu0
    %v123 = vadd.f32 0.0, %v122
    %124 = vmatmul.bf16.gmra.mxu0 %v91
    %v125 = vpop.f32.mrf.mxu0
    %v126 = vadd.f32 0.0, %v125
    %v127 = vpop.f32.mrf.mxu0
    %v128 = vadd.f32 0.0, %v127
    %129 = vmatmul.bf16.gmra.mxu0 %v94
    %v130 = vpop.f32.mrf.mxu0
    %v131 = vadd.f32 0.0, %v130
    %v132 = vpop.f32.mrf.mxu0
    %v133 = vadd.f32 0.0, %v132
    %134 = vmatmul.bf16.gmra.mxu0 %v97
    %v135 = vpop.f32.mrf.mxu0
    %v136 = vadd.f32 0.0, %v135
    %v137 = vpop.f32.mrf.mxu0
    %v138 = vadd.f32 0.0, %v137
    %139 = vmatmul.bf16.gmra.mxu0 %v100
    %v140 = vpop.f32.mrf.mxu0
    %v141 = vadd.f32 0.0, %v140
    %v142 = vpop.f32.mrf.mxu0
    %v143 = vadd.f32 0.0, %v142
    %144 = vmatmul.bf16.gmra.mxu0 %v103
    %v145 = vpop.f32.mrf.mxu0
    %v146 = vadd.f32 0.0, %v145
    %v147 = vpop.f32.mrf.mxu0
    %v148 = vadd.f32 0.0, %v147
    %149 = vmatmul.bf16.gmra.mxu0 %v106
    %v150 = vpop.f32.mrf.mxu0
    %v151 = vadd.f32 0.0, %v150
    %v152 = vpop.f32.mrf.mxu0
    %v153 = vadd.f32 0.0, %v152
    %154 = vmatmul.bf16.gmra.mxu0 %v109
    %v155 = vpop.f32.mrf.mxu0
    %v156 = vadd.f32 0.0, %v155
    %v157 = vpop.f32.mrf.mxu0
    %v158 = vadd.f32 0.0, %v157
    %159 = vdwg.mxu0
    %v160 = vld [vmem:[%s2] sm:$0x1]
    %v162 = vperm.slane %v160, 0
    %v164 = vmul.f32 %v121, %v162
    %v165 = vmul.f32 %v123, %v162
    %v166 = vmul.f32 %v126, %v162
    %v167 = vmul.f32 %v128, %v162
    %v168 = vmul.f32 %v131, %v162
    %v169 = vmul.f32 %v133, %v162
    %v170 = vmul.f32 %v136, %v162
    %v171 = vmul.f32 %v138, %v162
    %v172 = vmul.f32 %v141, %v162
    %v173 = vmul.f32 %v143, %v162
    %v174 = vmul.f32 %v146, %v162
    %v175 = vmul.f32 %v148, %v162
    %v176 = vmul.f32 %v151, %v162
    %v177 = vmul.f32 %v153, %v162
    %v178 = vmul.f32 %v156, %v162
    %v179 = vmul.f32 %v158, %v162
    %180 = vadd.xlane.f32.xlu0 %v164
    %v181 = vpop.xlane.xlu0 %180
    %182 = vadd.xlane.f32.xlu0 %v165
    %v183 = vpop.xlane.xlu0 %182
    %184 = vadd.xlane.f32.xlu0 %v166
    %v185 = vpop.xlane.xlu0 %184
    %186 = vadd.xlane.f32.xlu0 %v167
    %v187 = vpop.xlane.xlu0 %186
    %188 = vadd.xlane.f32.xlu0 %v168
    %v189 = vpop.xlane.xlu0 %188
    %190 = vadd.xlane.f32.xlu0 %v169
    %v191 = vpop.xlane.xlu0 %190
    %192 = vadd.xlane.f32.xlu0 %v170
    %v193 = vpop.xlane.xlu0 %192
    %194 = vadd.xlane.f32.xlu0 %v171
    %v195 = vpop.xlane.xlu0 %194
    %196 = vadd.xlane.f32.xlu0 %v172
    %v197 = vpop.xlane.xlu0 %196
    %198 = vadd.xlane.f32.xlu0 %v173
    %v199 = vpop.xlane.xlu0 %198
    %200 = vadd.xlane.f32.xlu0 %v174
    %v201 = vpop.xlane.xlu0 %200
    %202 = vadd.xlane.f32.xlu0 %v175
    %v203 = vpop.xlane.xlu0 %202
    %204 = vadd.xlane.f32.xlu0 %v176
    %v205 = vpop.xlane.xlu0 %204
    %206 = vadd.xlane.f32.xlu0 %v177
    %v207 = vpop.xlane.xlu0 %206
    %208 = vadd.xlane.f32.xlu0 %v178
    %v209 = vpop.xlane.xlu0 %208
    %210 = vadd.xlane.f32.xlu0 %v179
    %v211 = vpop.xlane.xlu0 %210
    %v212 = vsub.f32 0.0, %v181
    %v213 = vsub.f32 0.0, %v183
    %v214 = vsub.f32 0.0, %v185
    %v215 = vsub.f32 0.0, %v187
    %v216 = vsub.f32 0.0, %v189
    %v217 = vsub.f32 0.0, %v191
    %v218 = vsub.f32 0.0, %v193
    %v219 = vsub.f32 0.0, %v195
    %v220 = vsub.f32 0.0, %v197
    %v221 = vsub.f32 0.0, %v199
    %v222 = vsub.f32 0.0, %v201
    %v223 = vsub.f32 0.0, %v203
    %v224 = vsub.f32 0.0, %v205
    %v225 = vsub.f32 0.0, %v207
    %v226 = vsub.f32 0.0, %v209
    %v227 = vsub.f32 0.0, %v211
    %vm228 = vcmask 7168
    %229 = vst.msk [vmem:[%s5] sm:$0xff] %vm228, %v212
    %230 = vst.msk [vmem:[%s5 + $0x8] sm:$0xff] %vm228, %v213
    %231 = vst.msk [vmem:[%s5 + $0x10] sm:$0xff] %vm228, %v214
    %232 = vst.msk [vmem:[%s5 + $0x18] sm:$0xff] %vm228, %v215
    %233 = vst.msk [vmem:[%s5 + $0x20] sm:$0xff] %vm228, %v216
    %234 = vst.msk [vmem:[%s5 + $0x28] sm:$0xff] %vm228, %v217
    %235 = vst.msk [vmem:[%s5 + $0x30] sm:$0xff] %vm228, %v218
    %236 = vst.msk [vmem:[%s5 + $0x38] sm:$0xff] %vm228, %v219
    %237 = vst.msk [vmem:[%s5 + $0x40] sm:$0xff] %vm228, %v220
    %238 = vst.msk [vmem:[%s5 + $0x48] sm:$0xff] %vm228, %v221
    %239 = vst.msk [vmem:[%s5 + $0x50] sm:$0xff] %vm228, %v222
    %240 = vst.msk [vmem:[%s5 + $0x58] sm:$0xff] %vm228, %v223
    %241 = vst.msk [vmem:[%s5 + $0x60] sm:$0xff] %vm228, %v224
    %242 = vst.msk [vmem:[%s5 + $0x68] sm:$0xff] %vm228, %v225
    %243 = vst.msk [vmem:[%s5 + $0x70] sm:$0xff] %vm228, %v226
    %244 = vst.msk [vmem:[%s5 + $0x78] sm:$0xff] %vm228, %v227
    %v245 = vld [vmem:[%s3] sm:$0x1]
    %v247 = vperm.slane %v245, 0
    %v249 = vmul.f32 %v121, %v247
    %v250 = vmul.f32 %v123, %v247
    %v251 = vmul.f32 %v126, %v247
    %v252 = vmul.f32 %v128, %v247
    %v253 = vmul.f32 %v131, %v247
    %v254 = vmul.f32 %v133, %v247
    %v255 = vmul.f32 %v136, %v247
    %v256 = vmul.f32 %v138, %v247
    %v257 = vmul.f32 %v141, %v247
    %v258 = vmul.f32 %v143, %v247
    %v259 = vmul.f32 %v146, %v247
    %v260 = vmul.f32 %v148, %v247
    %v261 = vmul.f32 %v151, %v247
    %v262 = vmul.f32 %v153, %v247
    %v263 = vmul.f32 %v156, %v247
    %v264 = vmul.f32 %v158, %v247
    %265 = vadd.xlane.f32.xlu0 %v249
    %v266 = vpop.xlane.xlu0 %265
    %267 = vadd.xlane.f32.xlu0 %v250
    %v268 = vpop.xlane.xlu0 %267
    %269 = vadd.xlane.f32.xlu0 %v251
    %v270 = vpop.xlane.xlu0 %269
    %271 = vadd.xlane.f32.xlu0 %v252
    %v272 = vpop.xlane.xlu0 %271
    %273 = vadd.xlane.f32.xlu0 %v253
    %v274 = vpop.xlane.xlu0 %273
    %275 = vadd.xlane.f32.xlu0 %v254
    %v276 = vpop.xlane.xlu0 %275
    %277 = vadd.xlane.f32.xlu0 %v255
    %v278 = vpop.xlane.xlu0 %277
    %279 = vadd.xlane.f32.xlu0 %v256
    %v280 = vpop.xlane.xlu0 %279
    %281 = vadd.xlane.f32.xlu0 %v257
    %v282 = vpop.xlane.xlu0 %281
    %283 = vadd.xlane.f32.xlu0 %v258
    %v284 = vpop.xlane.xlu0 %283
    %285 = vadd.xlane.f32.xlu0 %v259
    %v286 = vpop.xlane.xlu0 %285
    %287 = vadd.xlane.f32.xlu0 %v260
    %v288 = vpop.xlane.xlu0 %287
    %289 = vadd.xlane.f32.xlu0 %v261
    %v290 = vpop.xlane.xlu0 %289
    %291 = vadd.xlane.f32.xlu0 %v262
    %v292 = vpop.xlane.xlu0 %291
    %293 = vadd.xlane.f32.xlu0 %v263
    %v294 = vpop.xlane.xlu0 %293
    %295 = vadd.xlane.f32.xlu0 %v264
    %v296 = vpop.xlane.xlu0 %295
    %v297 = vsub.f32 0.0, %v266
    %v298 = vsub.f32 0.0, %v268
    %v299 = vsub.f32 0.0, %v270
    %v300 = vsub.f32 0.0, %v272
    %v301 = vsub.f32 0.0, %v274
    %v302 = vsub.f32 0.0, %v276
    %v303 = vsub.f32 0.0, %v278
    %v304 = vsub.f32 0.0, %v280
    %v305 = vsub.f32 0.0, %v282
    %v306 = vsub.f32 0.0, %v284
    %v307 = vsub.f32 0.0, %v286
    %v308 = vsub.f32 0.0, %v288
    %v309 = vsub.f32 0.0, %v290
    %v310 = vsub.f32 0.0, %v292
    %v311 = vsub.f32 0.0, %v294
    %v312 = vsub.f32 0.0, %v296
    %313 = vst.msk [vmem:[%s6] sm:$0xff] %vm228, %v297
    %314 = vst.msk [vmem:[%s6 + $0x8] sm:$0xff] %vm228, %v298
    %315 = vst.msk [vmem:[%s6 + $0x10] sm:$0xff] %vm228, %v299
    %316 = vst.msk [vmem:[%s6 + $0x18] sm:$0xff] %vm228, %v300
    %317 = vst.msk [vmem:[%s6 + $0x20] sm:$0xff] %vm228, %v301
    %318 = vst.msk [vmem:[%s6 + $0x28] sm:$0xff] %vm228, %v302
    %319 = vst.msk [vmem:[%s6 + $0x30] sm:$0xff] %vm228, %v303
    %320 = vst.msk [vmem:[%s6 + $0x38] sm:$0xff] %vm228, %v304
    %321 = vst.msk [vmem:[%s6 + $0x40] sm:$0xff] %vm228, %v305
    %322 = vst.msk [vmem:[%s6 + $0x48] sm:$0xff] %vm228, %v306
    %323 = vst.msk [vmem:[%s6 + $0x50] sm:$0xff] %vm228, %v307
    %324 = vst.msk [vmem:[%s6 + $0x58] sm:$0xff] %vm228, %v308
    %325 = vst.msk [vmem:[%s6 + $0x60] sm:$0xff] %vm228, %v309
    %326 = vst.msk [vmem:[%s6 + $0x68] sm:$0xff] %vm228, %v310
    %327 = vst.msk [vmem:[%s6 + $0x70] sm:$0xff] %vm228, %v311
    %328 = vst.msk [vmem:[%s6 + $0x78] sm:$0xff] %vm228, %v312
    %v329 = vlaneseq
    %v330 = vand.u32 %v329, 127
    %vm331 = vcmp.eq.s32.totalorder %v330, 32
    %v332 = vsel %vm331, 1.0, %v121
    %v333 = vsel %vm331, 1.0, %v123
    %v334 = vsel %vm331, 1.0, %v126
    %v335 = vsel %vm331, 1.0, %v128
    %v336 = vsel %vm331, 1.0, %v131
    %v337 = vsel %vm331, 1.0, %v133
    %v338 = vsel %vm331, 1.0, %v136
    %v339 = vsel %vm331, 1.0, %v138
    %v340 = vsel %vm331, 1.0, %v141
    %v341 = vsel %vm331, 1.0, %v143
    %v342 = vsel %vm331, 1.0, %v146
    %v343 = vsel %vm331, 1.0, %v148
    %v344 = vsel %vm331, 1.0, %v151
    %v345 = vsel %vm331, 1.0, %v153
    %v346 = vsel %vm331, 1.0, %v156
    %v347 = vsel %vm331, 1.0, %v158
    %v348 = vpack.c.bf16 %v332, %v332
    %v349 = vpack.c.bf16 %v333, %v333
    %v350 = vpack.c.bf16 %v334, %v334
    %v351 = vpack.c.bf16 %v335, %v335
    %v352 = vpack.c.bf16 %v336, %v336
    %v353 = vpack.c.bf16 %v337, %v337
    %v354 = vpack.c.bf16 %v338, %v338
    %v355 = vpack.c.bf16 %v339, %v339
    %v356 = vpack.c.bf16 %v340, %v340
    %v357 = vpack.c.bf16 %v341, %v341
    %v358 = vpack.c.bf16 %v342, %v342
    %v359 = vpack.c.bf16 %v343, %v343
    %v360 = vpack.c.bf16 %v344, %v344
    %v361 = vpack.c.bf16 %v345, %v345
    %v362 = vpack.c.bf16 %v346, %v346
    %v363 = vpack.c.bf16 %v347, %v347
    %364 = vst [vmem:[#allocation2] sm:$0xf] %v348
    %365 = vst [vmem:[#allocation2 + $0x4] sm:$0xf] %v349
    %366 = vst [vmem:[#allocation2 + $0x8] sm:$0xf] %v350
    %367 = vst [vmem:[#allocation2 + $0xc] sm:$0xf] %v351
    %368 = vst [vmem:[#allocation2 + $0x10] sm:$0xf] %v352
    %369 = vst [vmem:[#allocation2 + $0x14] sm:$0xf] %v353
    %370 = vst [vmem:[#allocation2 + $0x18] sm:$0xf] %v354
    %371 = vst [vmem:[#allocation2 + $0x1c] sm:$0xf] %v355
    %372 = vst [vmem:[#allocation2 + $0x20] sm:$0xf] %v356
    %373 = vst [vmem:[#allocation2 + $0x24] sm:$0xf] %v357
    %374 = vst [vmem:[#allocation2 + $0x28] sm:$0xf] %v358
    %375 = vst [vmem:[#allocation2 + $0x2c] sm:$0xf] %v359
    %376 = vst [vmem:[#allocation2 + $0x30] sm:$0xf] %v360
    %377 = vst [vmem:[#allocation2 + $0x34] sm:$0xf] %v361
    %378 = vst [vmem:[#allocation2 + $0x38] sm:$0xf] %v362
    %379 = vst [vmem:[#allocation2 + $0x3c] sm:$0xf] %v363
    // Predicated region
    $region18: #{tpu_custom_call.1} parent=1 // pred_check
      _
    $region19: #{tpu_custom_call.1} parent=1 // pred_check_branch
      %381 = sbr.rel (0) target = $region21
    $region20: #{tpu_custom_call.1} parent=1 // pred_region
      %383 = vsyncadd [#allocation3], 0
      %s384 = sshll.u32 [#allocation2], 4
      %s385 = int_to_ptr.vmem [resolvable:$true] %s384
      %s386 = sshll.u32 %s4, 4
      %s387 = int_to_ptr.hbm [resolvable:$true] %s386
      %392 = dma.vmem_to_hbm [thread:$0]  %s385, 1024, %s387, [#allocation3], 64, 64, 4
    $region21: #{tpu_custom_call.1} parent=1 // pred_fallthru
      _
    // Predicated region
    $region22: #{tpu_custom_call.1} parent=1 // pred_check
      _
    $region23: #{tpu_custom_call.1} parent=1 // pred_check_branch
      %394 = sbr.rel (0) target = $region25
    $region24: #{tpu_custom_call.1} parent=1 // pred_region
      _
    $region25: #{tpu_custom_call.1} parent=1 // pred_fallthru
      _
    // Predicated region
    $region26: #{tpu_custom_call.1} parent=1 // pred_check
      _
    $region27: #{tpu_custom_call.1} parent=1 // pred_check_branch
      %396 = sbr.rel (0) target = $region29
    $region28: #{tpu_custom_call.1} parent=1 // pred_region
      _
    $region29: #{tpu_custom_call.1} parent=1 // pred_fallthru
      _
    // Predicated region
    $region30: #{tpu_custom_call.1} parent=1 // pred_check
      _
    $region31: #{tpu_custom_call.1} parent=1 // pred_check_branch
      %398 = sbr.rel (0) target = $region33
    $region32: #{tpu_custom_call.1} parent=1 // pred_region
      %400 = dma.done [#allocation3], 1024
    $region33: #{tpu_custom_call.1} parent=1 // pred_fallthru
      _
    // Predicated region
    $region34: #{tpu_custom_call.1} parent=1 // pred_check
      _
    $region35: #{tpu_custom_call.1} parent=1 // pred_check_branch
      %402 = sbr.rel (0) target = $region37
    $region36: #{tpu_custom_call.1} parent=1 // pred_region
      _
    $region37: #{tpu_custom_call.1} parent=1 // pred_fallthru
      _
    // Predicated region
    $region38: #{tpu_custom_call.1} parent=1 // pred_check
      _
    $region39: #{tpu_custom_call.1} parent=1 // pred_check_branch
      %404 = sbr.rel (0) target = $region41
    $region40: #{tpu_custom_call.1} parent=1 // pred_region
      _
    $region41: #{tpu_custom_call.1} parent=1 // pred_fallthru
      _
    %405 = vsyncpa [#allocation3], 1

</llo_original>
